<compile_context>
chip_gen: v7x
topology: tpu7x:2x2x1
jax: 0.10.0
libtpu: 0.0.40
codegen_flags: <defaults>
</compile_context>

<pallas_src>
import functools

import jax
import jax.numpy as jnp
from jax import lax
from jax.experimental import pallas as pl
from jax.experimental.pallas import tpu as pltpu


# Safe on v5e/v6e (128 MiB physical) and v7x (64 MiB physical).
_VMEM_LIMIT_BYTES = 48 * 1024 * 1024


def _round_up(x, m):
    return -(-x // m) * m


# ----------------------------------------------------------------------------
# Kernel 1: hoisted input projection for both directions, time folded into M.
#   gates[row] = emb[row] @ [W_ih_f | W_ih_b] + [b_f | b_b]        (rows, 8H)
# ----------------------------------------------------------------------------
def _input_projection_kernel(x_ref,    # (Mt, E)  bf16   rows = time*batch
                             w_ref,    # (E, 8H)  bf16   [fwd | bwd], (i,f,o,g)
                             b_ref,    # (1, 8H)  f32    b_ih + b_hh, both dirs
                             gf_ref,   # (Mt, 4H) bf16   forward gates
                             gb_ref):  # (Mt, 4H) bf16   backward gates
    h4 = gf_ref.shape[-1]
    g = jnp.dot(x_ref[...], w_ref[...],
                preferred_element_type=jnp.float32) + b_ref[...]
    gf_ref[...] = g[:, :h4].astype(gf_ref.dtype)
    gb_ref[...] = g[:, h4:].astype(gb_ref.dtype)


# ----------------------------------------------------------------------------
# Kernel 2: fused forward/backward recurrence (time-chunked) + classifier head.
# ----------------------------------------------------------------------------
def _recurrence_kernel(gf_ref,     # (Tt, Bp, 4H) bf16  fwd gates, chunk c
                       gb_ref,     # (Tt, Bp, 4H) bf16  bwd gates, chunk C-1-c
                       w_hh_ref,   # (H, 8H) bf16  [w_hh_f | w_hh_b]
                       w_fc_ref,   # (2H, O) f32
                       b_fc_ref,   # (1, O)  f32
                       out_ref,    # (Bp, O) f32
                       h_ref,      # (2Bp, H) f32 scratch, rows [fwd ; bwd]
                       c_ref,      # (2Bp, H) f32 scratch
                       *, t_valid, apply_mask):
    c_idx = pl.program_id(0)
    n_chunks = pl.num_programs(0)
    tt, bp, h4 = gf_ref.shape
    hd = h4 // 4

    @pl.when(c_idx == 0)
    def _():
        h_ref[...] = jnp.zeros_like(h_ref)
        c_ref[...] = jnp.zeros_like(c_ref)

    # NOTE: loop-invariant weight blocks could be single-buffered
    # (pipeline_mode=pl.Buffered(1)) to free VMEM for larger chunks; left at
    # the default double-buffering for maximum compatibility.
    w_hh = w_hh_ref[...]                                       # (H, 8H) bf16

    def step(j, carry):
        h_st, c_st = carry                                     # (2Bp, H) f32
        # Stacked pre-activations from the hoisted projection: fwd gates at
        # global step s = c*Tt+j on top, bwd gates at reversed step below.
        pre_x = jnp.concatenate(
            [gf_ref[j], gb_ref[tt - 1 - j]], axis=0).astype(jnp.float32)
        # One MXU push for both directions: (2Bp, H) @ (H, 8H).
        hh = jnp.dot(h_st.astype(jnp.bfloat16), w_hh,
                     preferred_element_type=jnp.float32)       # (2Bp, 8H)
        pre_h = jnp.concatenate([hh[:bp, :h4], hh[bp:, h4:]], axis=0)
        gates = pre_x + pre_h                                  # (2Bp, 4H)
        # Gate columns ordered (i, f, o, g): sigmoid on i/f/o only, tanh on g.
        s = jax.nn.sigmoid(gates[:, :3 * hd])
        g_g = jnp.tanh(gates[:, 3 * hd:])
        i_g = s[:, 0 * hd:1 * hd]
        f_g = s[:, 1 * hd:2 * hd]
        o_g = s[:, 2 * hd:3 * hd]
        c_new = f_g * c_st + i_g * g_g
        h_new = o_g * jnp.tanh(c_new)
        if apply_mask:   # only traced when T % Tt != 0 (padded time steps)
            valid = (c_idx * tt + j) < t_valid
            h_new = jnp.where(valid, h_new, h_st)
            c_new = jnp.where(valid, c_new, c_st)
        return h_new, c_new

    h_st, c_st = lax.fori_loop(0, tt, step, (h_ref[...], c_ref[...]),
                               unroll=True)
    h_ref[...] = h_st
    c_ref[...] = c_st

    @pl.when(c_idx == n_chunks - 1)
    def _():
        # torch.cat((hidden[-2], hidden[-1]), dim=1) == [last fwd h, last bwd h]
        hidden = jnp.concatenate([h_st[:bp], h_st[bp:]], axis=1)   # (Bp, 2H)
        logits = jnp.dot(hidden, w_fc_ref[...],
                         preferred_element_type=jnp.float32) + b_fc_ref[...]
        out_ref[...] = jax.nn.sigmoid(logits)


# ----------------------------------------------------------------------------
# Parameters (PyTorch-like shapes / scales; gate order i, f, g, o).
# ----------------------------------------------------------------------------
def init_params(key, vocab_size, embedding_dim, hidden_dim, out_dim):
    E, H, O = embedding_dim, hidden_dim, out_dim
    ks = jax.random.split(key, 12)
    s_lstm = 1.0 / jnp.sqrt(jnp.float32(H))
    s_fc = 1.0 / jnp.sqrt(jnp.float32(2 * H))

    def u(k, shape, scale):
        return jax.random.uniform(k, shape, jnp.float32, -scale, scale)

    return {
        "embedding": jax.random.normal(ks[0], (vocab_size + 1, E), jnp.float32),
        # forward direction
        "w_ih_f": u(ks[1], (4 * H, E), s_lstm),
        "w_hh_f": u(ks[2], (4 * H, H), s_lstm),
        "b_ih_f": u(ks[3], (4 * H,), s_lstm),
        "b_hh_f": u(ks[4], (4 * H,), s_lstm),
        # backward direction
        "w_ih_b": u(ks[5], (4 * H, E), s_lstm),
        "w_hh_b": u(ks[6], (4 * H, H), s_lstm),
        "b_ih_b": u(ks[7], (4 * H,), s_lstm),
        "b_hh_b": u(ks[8], (4 * H,), s_lstm),
        # final linear
        "w_fc": u(ks[9], (O, 2 * H), s_fc),
        "b_fc": u(ks[10], (O,), s_fc),
    }


# ----------------------------------------------------------------------------
# Wrapper: embedding gather (glue) + two pallas_calls.
# ----------------------------------------------------------------------------
def lstm_classifier_forward(text, params, *, time_chunk=32, proj_rows=512):
    """text: (B, T) int32 token ids.  Returns (B, out_dim) sigmoid outputs."""
    emb_table = params["embedding"]                     # (V+1, E)
    B, T = text.shape
    E = emb_table.shape[1]
    H = params["w_hh_f"].shape[1]
    O = params["w_fc"].shape[0]
    H4, H8 = 4 * H, 8 * H

    # Pad batch to a sublane multiple (8).
    Bp = max(8, _round_up(B, 8))

    # Kernel-2 time chunking: Tt recurrence steps per grid iteration.
    Tt = min(T, time_chunk)
    Tp = _round_up(T, Tt)
    n_chunks = Tp // Tt
    needs_mask = (Tp != T)

    # Kernel-1 tiling: time folded into the matmul M dimension.
    M_need = Tp * Bp
    Mt = min(M_need, max(Bp, _round_up(proj_rows, Bp)))
    Mp = _round_up(M_need, Mt)

    # Embedding gather (wrapper glue), time-major, flattened to (rows, E).
    emb = jnp.take(emb_table, text.T, axis=0)            # (T, B, E) f32
    emb = jnp.pad(emb, ((0, 0), (0, Bp - B), (0, 0)))    # (T, Bp, E)
    emb = emb.reshape(T * Bp, E)
    emb = jnp.pad(emb, ((0, Mp - T * Bp), (0, 0))).astype(jnp.bfloat16)

    # Weight prep (off the critical path): gate rows reordered from PyTorch's
    # (i, f, g, o) to (i, f, o, g) so the kernel's sigmoid/tanh split is a
    # single contiguous column split; (in, out) layout; fwd|bwd concatenated;
    # biases folded into the projection.
    def reorder(w):
        i, f, g, o = jnp.split(w, 4, axis=0)
        return jnp.concatenate([i, f, o, g], axis=0)

    w_ih_cat = jnp.concatenate(
        [reorder(params["w_ih_f"]).T, reorder(params["w_ih_b"]).T],
        axis=1).astype(jnp.bfloat16)                     # (E, 8H)
    b_cat = jnp.concatenate(
        [reorder(params["b_ih_f"] + params["b_hh_f"]),
         reorder(params["b_ih_b"] + params["b_hh_b"])]).reshape(1, H8)
    w_hh_cat = jnp.concatenate(
        [reorder(params["w_hh_f"]).T, reorder(params["w_hh_b"]).T],
        axis=1).astype(jnp.bfloat16)                     # (H, 8H)
    w_fc = params["w_fc"].T                              # (2H, O) f32
    b_fc = params["b_fc"].reshape(1, O)

    # --- Kernel 1: hoisted input projection, big-M matmul tiles (parallel) ---
    gf_flat, gb_flat = pl.pallas_call(
        _input_projection_kernel,
        out_shape=(jax.ShapeDtypeStruct((Mp, H4), jnp.bfloat16),
                   jax.ShapeDtypeStruct((Mp, H4), jnp.bfloat16)),
        grid=(Mp // Mt,),
        in_specs=[
            pl.BlockSpec((Mt, E), lambda m: (m, 0)),
            pl.BlockSpec((E, H8), lambda m: (0, 0)),
            pl.BlockSpec((1, H8), lambda m: (0, 0)),
        ],
        out_specs=(
            pl.BlockSpec((Mt, H4), lambda m: (m, 0)),
            pl.BlockSpec((Mt, H4), lambda m: (m, 0)),
        ),
        compiler_params=pltpu.CompilerParams(
            dimension_semantics=("parallel",),
            vmem_limit_bytes=_VMEM_LIMIT_BYTES),
    )(emb, w_ih_cat, b_cat)

    # Re-view as (time, batch, 4H) streams.  fwd is padded at the end, bwd at
    # the front so that a block-reversed index_map plus a reversed inner index
    # walks it back-to-front.  When T % Tt == 0 all of this is a no-op.
    gfp = gf_flat[:Tp * Bp].reshape(Tp, Bp, H4)
    if needs_mask:
        gbp = jnp.pad(gb_flat[:T * Bp].reshape(T, Bp, H4),
                      ((Tp - T, 0), (0, 0), (0, 0)))
    else:
        gbp = gb_flat[:Tp * Bp].reshape(Tp, Bp, H4)

    # --- Kernel 2: fused bidirectional recurrence + head (serial chunks) ---
    kernel2 = functools.partial(_recurrence_kernel,
                                t_valid=T, apply_mask=needs_mask)
    out = pl.pallas_call(
        kernel2,
        out_shape=jax.ShapeDtypeStruct((Bp, O), jnp.float32),
        grid=(n_chunks,),
        in_specs=[
            pl.BlockSpec((Tt, Bp, H4), lambda c: (c, 0, 0)),            # fwd
            pl.BlockSpec((Tt, Bp, H4),
                         lambda c: (n_chunks - 1 - c, 0, 0)),           # bwd
            pl.BlockSpec((H, H8), lambda c: (0, 0)),
            pl.BlockSpec((2 * H, O), lambda c: (0, 0)),
            pl.BlockSpec((1, O), lambda c: (0, 0)),
        ],
        out_specs=pl.BlockSpec((Bp, O), lambda c: (0, 0)),
        scratch_shapes=[pltpu.VMEM((2 * Bp, H), jnp.float32),
                        pltpu.VMEM((2 * Bp, H), jnp.float32)],
        compiler_params=pltpu.CompilerParams(
            dimension_semantics=("arbitrary",),
            vmem_limit_bytes=_VMEM_LIMIT_BYTES),
    )(gfp, gbp, w_hh_cat, w_fc, b_fc)

    return out[:B]


if __name__ == "__main__":
    # Small, module-consistent shapes.
    vocab_size, embedding_dim, hidden_dim, out_dim = 50, 32, 32, 4
    batch, seq = 2, 8

    key = jax.random.PRNGKey(0)
    k_text, k_params = jax.random.split(key)

    text = jax.random.randint(k_text, (batch, seq), 0, vocab_size + 1,
                              dtype=jnp.int32)
    params = init_params(k_params, vocab_size, embedding_dim, hidden_dim,
                         out_dim)

    out = lstm_classifier_forward(text, params)
    out = jax.block_until_ready(out)

    assert out.shape == (batch, out_dim)
    assert bool(jnp.all(jnp.isfinite(out)))
    assert bool(jnp.all((out > 0.0) & (out < 1.0)))  # sigmoid range
    print("KERNEL_OK")
</pallas_src>

<mosaic_0001>
module attributes {stable_mosaic.version = 11 : i64} {
  func.func @_input_projection_kernel(%arg0: i32, %arg1: memref<64x32xbf16, #tpu.memory_space<vmem>>, %arg2: memref<32x256xbf16, #tpu.memory_space<vmem>>, %arg3: memref<1x256xf32, #tpu.memory_space<vmem>>, %arg4: memref<64x128xbf16, #tpu.memory_space<vmem>>, %arg5: memref<64x128xbf16, #tpu.memory_space<vmem>>) attributes {dimension_semantics = [#tpu.dimension_semantics<parallel>], iteration_bounds = array<i64: 1>, scalar_prefetch = 0 : i64, scratch_operands = 0 : i64, tpu.core_type = #tpu.core_type<tc>, window_params = [{transform_indices = @transform_0, window_bounds = array<i64: 64, 32>}, {pipeline_mode = #tpu.pipeline_mode<synchronous>, transform_indices = @transform_1, window_bounds = array<i64: 32, 256>}, {pipeline_mode = #tpu.pipeline_mode<synchronous>, transform_indices = @transform_2, window_bounds = array<i64: 1, 256>}, {transform_indices = @transform_3, window_bounds = array<i64: 64, 128>}, {transform_indices = @transform_4, window_bounds = array<i64: 64, 128>}]} {
    %c0 = arith.constant 0 : index
    %c0_0 = arith.constant 0 : index
    %0 = vector.load %arg1[%c0, %c0_0] : memref<64x32xbf16, #tpu.memory_space<vmem>>, vector<64x32xbf16>
    %c0_1 = arith.constant 0 : index
    %c0_2 = arith.constant 0 : index
    %1 = vector.load %arg2[%c0_1, %c0_2] : memref<32x256xbf16, #tpu.memory_space<vmem>>, vector<32x256xbf16>
    %cst = arith.constant dense<0.000000e+00> : vector<64x256xf32>
    %2 = tpu.matmul %0, %1, %cst {dimension_numbers = #tpu.dot_dimension_numbers<[1], [0], [0], [1], [0, 0, 1, 1], [], []>} : vector<64x32xbf16>, vector<32x256xbf16>, vector<64x256xf32> -> vector<64x256xf32>
    %c0_3 = arith.constant 0 : index
    %c0_4 = arith.constant 0 : index
    %3 = vector.load %arg3[%c0_3, %c0_4] : memref<1x256xf32, #tpu.memory_space<vmem>>, vector<1x256xf32>
    %4 = vector.broadcast %3 : vector<1x256xf32> to vector<64x256xf32>
    %5 = arith.addf %2, %4 : vector<64x256xf32>
    %6 = vector.extract_strided_slice %5 {offsets = [0, 0], sizes = [64, 128], strides = [1, 1]} : vector<64x256xf32> to vector<64x128xf32>
    %7 = arith.truncf %6 : vector<64x128xf32> to vector<64x128xbf16>
    %c0_5 = arith.constant 0 : index
    %c0_6 = arith.constant 0 : index
    %8 = vector.load %arg4[%c0_5, %c0_6] : memref<64x128xbf16, #tpu.memory_space<vmem>>, vector<64x128xbf16>
    tpu.vector_store %arg4[%c0_5, %c0_6], %7 {strides = array<i32>} : memref<64x128xbf16, #tpu.memory_space<vmem>>, vector<64x128xbf16>,
    %9 = vector.extract_strided_slice %5 {offsets = [0, 128], sizes = [64, 128], strides = [1, 1]} : vector<64x256xf32> to vector<64x128xf32>
    %10 = arith.truncf %9 : vector<64x128xf32> to vector<64x128xbf16>
    %c0_7 = arith.constant 0 : index
    %c0_8 = arith.constant 0 : index
    %11 = vector.load %arg5[%c0_7, %c0_8] : memref<64x128xbf16, #tpu.memory_space<vmem>>, vector<64x128xbf16>
    tpu.vector_store %arg5[%c0_7, %c0_8], %10 {strides = array<i32>} : memref<64x128xbf16, #tpu.memory_space<vmem>>, vector<64x128xbf16>,
    return
  }
  func.func @transform_0(%arg0: i32) -> (i32, i32) {
    %c0_i32 = arith.constant 0 : i32
    %c0_i32_0 = arith.constant 0 : i32
    return %arg0, %c0_i32 : i32, i32
  }
  func.func @transform_1(%arg0: i32) -> (i32, i32) {
    %c0_i32 = arith.constant 0 : i32
    %c0_i32_0 = arith.constant 0 : i32
    %c0_i32_1 = arith.constant 0 : i32
    return %c0_i32, %c0_i32_0 : i32, i32
  }
  func.func @transform_2(%arg0: i32) -> (i32, i32) {
    %c0_i32 = arith.constant 0 : i32
    %c0_i32_0 = arith.constant 0 : i32
    %c0_i32_1 = arith.constant 0 : i32
    return %c0_i32, %c0_i32_0 : i32, i32
  }
  func.func @transform_3(%arg0: i32) -> (i32, i32) {
    %c0_i32 = arith.constant 0 : i32
    %c0_i32_0 = arith.constant 0 : i32
    return %arg0, %c0_i32 : i32, i32
  }
  func.func @transform_4(%arg0: i32) -> (i32, i32) {
    %c0_i32 = arith.constant 0 : i32
    %c0_i32_0 = arith.constant 0 : i32
    return %arg0, %c0_i32 : i32, i32
  }
}

</mosaic_0001>

<llo_original>
// kernel: tpu_custom_call.1
$region0: #{tpu_custom_call.1}
  #allocation0 [shape = 'u32[]', space=smem, size = 0x4, offset = 0x4, fixed_abs, tag = 'smem constant byte address 0x4 - core index']
  #allocation1 [shape = 'u32[144,128]{1,0:T(1,128)}', space=vmem, size = 0x12000, scoped, tag = 'internal scratch']
  %s0 = inlined_call_operand.vmem [shape: bf16[64,32], index: 0, kind: input, shape index: {}]
  %s1 = inlined_call_operand.vmem [shape: bf16[32,256], index: 1, kind: input, shape index: {}]
  %s2 = inlined_call_operand.vmem [shape: f32[1,256], index: 2, kind: input, shape index: {}]
  %s3 = inlined_call_operand.hbm [shape: bf16[64,128], index: 3, kind: output, shape index: {0}]
  %s4 = inlined_call_operand.hbm [shape: bf16[64,128], index: 4, kind: output, shape index: {1}]
  %5 = xla_tuple %s3, %s4
  %s6 = sld [smem:[#allocation0]]
  $region30: #{tpu_custom_call.1} parent=0
    _
  %s8 = ssub.s32 1, %s6
  %s9 = scalar_select 0, %s8, %s6
  $region1: #{tpu_custom_call.1} parent=0
    #allocation2 [shape = 'u8[16384]{0}', space=vmem, size = 0x4000, scoped, tag = 'output window, operand 0, single buffered']
    #allocation3 [shape = 's32[1]{0}', space=sflag, size = 0x4, scoped, tag = 'scoped memory for tpu_custom_call.1']
    #allocation4 [shape = 'u8[16384]{0}', space=vmem, size = 0x4000, scoped, tag = 'output window, operand 1, single buffered']
    #allocation5 [shape = 's32[1]{0}', space=sflag, size = 0x4, scoped, tag = 'scoped memory for tpu_custom_call.1']
    %10 = vsyncpa [#allocation3], 0
    %11 = vsyncpa [#allocation5], 0
    // Predicated region
    $region2: #{tpu_custom_call.1} parent=1 // pred_check
      _
    $region3: #{tpu_custom_call.1} parent=1 // pred_check_branch
      %13 = sbr.rel (0) target = $region5
    $region4: #{tpu_custom_call.1} parent=1 // pred_region
      _
    $region5: #{tpu_custom_call.1} parent=1 // pred_fallthru
      _
    // Predicated region
    $region6: #{tpu_custom_call.1} parent=1 // pred_check
      _
    $region7: #{tpu_custom_call.1} parent=1 // pred_check_branch
      %15 = sbr.rel (0) target = $region9
    $region8: #{tpu_custom_call.1} parent=1 // pred_region
      _
    $region9: #{tpu_custom_call.1} parent=1 // pred_fallthru
      _
    // Predicated region
    $region10: #{tpu_custom_call.1} parent=1 // pred_check
      _
    $region11: #{tpu_custom_call.1} parent=1 // pred_check_branch
      %17 = sbr.rel (0) target = $region13
    $region12: #{tpu_custom_call.1} parent=1 // pred_region
      _
    $region13: #{tpu_custom_call.1} parent=1 // pred_fallthru
      _
    %v19 = vld [vmem:[%s0] sm:$0xf]
    %v20 = vld [vmem:[%s0 + $0x4] sm:$0xf]
    %v21 = vld [vmem:[%s0 + $0x8] sm:$0xf]
    %v22 = vld [vmem:[%s0 + $0xc] sm:$0xf]
    %v23 = vld [vmem:[%s0 + $0x10] sm:$0xf]
    %v24 = vld [vmem:[%s0 + $0x14] sm:$0xf]
    %v25 = vld [vmem:[%s0 + $0x18] sm:$0xf]
    %v26 = vld [vmem:[%s0 + $0x1c] sm:$0xf]
    %v27 = vld [vmem:[%s1] sm:$0xff]
    %v28 = vld [vmem:[%s1 + $0x8] sm:$0xff]
    %v29 = vld [vmem:[%s1 + $0x10] sm:$0xff]
    %v30 = vld [vmem:[%s1 + $0x18] sm:$0xff]
    %v31 = vld [vmem:[%s2] sm:$0x3]
    %v33 = vlaneseq
    %v34 = vshrl.u32 %v33, 7
    %v35 = vsub.s32 0, %v34
    %v36 = vrot.slane %v31, %v35
    %v37 = vlaneseq
    %v38 = vshrl.u32 %v37, 7
    %v39 = vsub.s32 1, %v38
    %v40 = vrot.slane %v31, %v39
    %v51 = vunpack.c.l.b16 %v19
    %v52 = vunpack.c.l.b16 %v20
    %v53 = vunpack.c.l.b16 %v21
    %v54 = vunpack.c.l.b16 %v22
    %v55 = vunpack.c.l.b16 %v23
    %v56 = vunpack.c.l.b16 %v24
    %v57 = vunpack.c.l.b16 %v25
    %v58 = vunpack.c.l.b16 %v26
    %v59 = vpack.c.b16 %v52, %v51
    %v60 = vpack.c.b16 %v54, %v53
    %v61 = vpack.c.b16 %v56, %v55
    %v62 = vpack.c.b16 %v58, %v57
    %v67 = vunpack.c.l.b16 %v27
    %v68 = vunpack.c.h.b16 %v27
    %v69 = vunpack.c.l.b16 %v28
    %v70 = vunpack.c.h.b16 %v28
    %v71 = vunpack.c.l.b16 %v29
    %v72 = vunpack.c.h.b16 %v29
    %v73 = vunpack.c.l.b16 %v30
    %v74 = vunpack.c.h.b16 %v30
    %v75 = vpack.c.b16 %v69, %v67
    %v76 = vpack.c.b16 %v70, %v68
    %v77 = vpack.c.b16 %v73, %v71
    %v78 = vpack.c.b16 %v74, %v72
    %vm83 = vcmask 261120
    %v85 = vsel %vm83, %v59, 0
    %v88 = vsel %vm83, %v60, 0
    %v91 = vsel %vm83, %v61, 0
    %v94 = vsel %vm83, %v62, 0
    %96 = vmatprep.subr.bf16.mxu0 %v76
    %97 = vmatpush1.bf16.msra.mxu0 %v75
    %98 = vmatprep.subr.bf16.mxu0 %v78
    %99 = vmatpush1.bf16.msra.mxu0 %v77
    %100 = vmatprep.subr.bf16.mxu0 0
    %101 = vmatpush1.bf16.msra.mxu0 0
    %102 = vmatprep.subr.bf16.mxu0 0
    %103 = vmatpush1.bf16.msra.mxu0 0
    %104 = vmatprep.subr.bf16.mxu0 0
    %105 = vmatpush1.bf16.msra.mxu0 0
    %106 = vmatprep.subr.bf16.mxu0 0
    %107 = vmatpush1.bf16.msra.mxu0 0
    %108 = vmatprep.subr.bf16.mxu0 0
    %109 = vmatpush1.bf16.msra.mxu0 0
    %110 = vmatprep.subr.bf16.mxu0 0
    %111 = vmatpush1.bf16.msra.mxu0 0
    %112 = vmatprep.subr.bf16.mxu0 0
    %113 = vmatpush1.bf16.msra.mxu0 0
    %114 = vmatprep.subr.bf16.mxu0 0
    %115 = vmatpush1.bf16.msra.mxu0 0
    %116 = vmatprep.subr.bf16.mxu0 0
    %117 = vmatpush1.bf16.msra.mxu0 0
    %118 = vmatprep.subr.bf16.mxu0 0
    %119 = vmatpush1.bf16.msra.mxu0 0
    %120 = vmatprep.subr.bf16.mxu0 0
    %121 = vmatpush1.bf16.msra.mxu0 0
    %122 = vmatprep.subr.bf16.mxu0 0
    %123 = vmatpush1.bf16.msra.mxu0 0
    %124 = vmatprep.subr.bf16.mxu0 0
    %125 = vmatpush1.bf16.msra.mxu0 0
    %126 = vmatprep.subr.bf16.mxu0 0
    %127 = vmatpush1.bf16.msra.mxu0 0
    %128 = vmatprep.mubr.bf16.mxu0 0
    %129 = vmatmul.mubr.bf16.gmra.mrb[0].mxu0 %v85
    %v130 = vpop.f32.mrb[0].mxu0
    %v131 = vadd.f32 %v36, %v130
    %v132 = vpop.f32.mrb[0].mxu0
    %v133 = vadd.f32 %v40, %v132
    %v134 = vpop.f32.mrb[0].mxu0
    %v135 = vadd.f32 %v36, %v134
    %v136 = vpop.f32.mrb[0].mxu0
    %v137 = vadd.f32 %v40, %v136
    %138 = vmatprep.mubr.bf16.mxu0 0
    %139 = vmatmul.mubr.bf16.gmra.mrb[0].mxu0 %v88
    %v140 = vpop.f32.mrb[0].mxu0
    %v141 = vadd.f32 %v36, %v140
    %v142 = vpop.f32.mrb[0].mxu0
    %v143 = vadd.f32 %v40, %v142
    %v144 = vpop.f32.mrb[0].mxu0
    %v145 = vadd.f32 %v36, %v144
    %v146 = vpop.f32.mrb[0].mxu0
    %v147 = vadd.f32 %v40, %v146
    %148 = vmatprep.mubr.bf16.mxu0 0
    %149 = vmatmul.mubr.bf16.gmra.mrb[0].mxu0 %v91
    %v150 = vpop.f32.mrb[0].mxu0
    %v151 = vadd.f32 %v36, %v150
    %v152 = vpop.f32.mrb[0].mxu0
    %v153 = vadd.f32 %v40, %v152
    %v154 = vpop.f32.mrb[0].mxu0
    %v155 = vadd.f32 %v36, %v154
    %v156 = vpop.f32.mrb[0].mxu0
    %v157 = vadd.f32 %v40, %v156
    %158 = vmatprep.mubr.bf16.mxu0 0
    %159 = vmatmul.mubr.bf16.gmra.mrb[0].mxu0 %v94
    %v160 = vpop.f32.mrb[0].mxu0
    %v161 = vadd.f32 %v36, %v160
    %v162 = vpop.f32.mrb[0].mxu0
    %v163 = vadd.f32 %v40, %v162
    %v164 = vpop.f32.mrb[0].mxu0
    %v165 = vadd.f32 %v36, %v164
    %v166 = vpop.f32.mrb[0].mxu0
    %v167 = vadd.f32 %v40, %v166
    %168 = vdwg.mxu0
    %v169 = vpack.c.bf16 %v135, %v131
    %v170 = vpack.c.bf16 %v145, %v141
    %v171 = vpack.c.bf16 %v155, %v151
    %v172 = vpack.c.bf16 %v165, %v161
    %v177 = vunpack.c.l.b16 %v169
    %v178 = vunpack.c.h.b16 %v169
    %v179 = vunpack.c.l.b16 %v170
    %v180 = vunpack.c.h.b16 %v170
    %v181 = vunpack.c.l.b16 %v171
    %v182 = vunpack.c.h.b16 %v171
    %v183 = vunpack.c.l.b16 %v172
    %v184 = vunpack.c.h.b16 %v172
    %v185 = vpack.c.b16 %v177, %v177
    %v186 = vpack.c.b16 %v178, %v178
    %v187 = vpack.c.b16 %v179, %v179
    %v188 = vpack.c.b16 %v180, %v180
    %v189 = vpack.c.b16 %v181, %v181
    %v190 = vpack.c.b16 %v182, %v182
    %v191 = vpack.c.b16 %v183, %v183
    %v192 = vpack.c.b16 %v184, %v184
    %201 = vst [vmem:[#allocation2] sm:$0xf] %v185
    %202 = vst [vmem:[#allocation2 + $0x4] sm:$0xf] %v186
    %203 = vst [vmem:[#allocation2 + $0x8] sm:$0xf] %v187
    %204 = vst [vmem:[#allocation2 + $0xc] sm:$0xf] %v188
    %205 = vst [vmem:[#allocation2 + $0x10] sm:$0xf] %v189
    %206 = vst [vmem:[#allocation2 + $0x14] sm:$0xf] %v190
    %207 = vst [vmem:[#allocation2 + $0x18] sm:$0xf] %v191
    %208 = vst [vmem:[#allocation2 + $0x1c] sm:$0xf] %v192
    %v209 = vpack.c.bf16 %v137, %v133
    %v210 = vpack.c.bf16 %v147, %v143
    %v211 = vpack.c.bf16 %v157, %v153
    %v212 = vpack.c.bf16 %v167, %v163
    %v217 = vunpack.c.l.b16 %v209
    %v218 = vunpack.c.h.b16 %v209
    %v219 = vunpack.c.l.b16 %v210
    %v220 = vunpack.c.h.b16 %v210
    %v221 = vunpack.c.l.b16 %v211
    %v222 = vunpack.c.h.b16 %v211
    %v223 = vunpack.c.l.b16 %v212
    %v224 = vunpack.c.h.b16 %v212
    %v225 = vpack.c.b16 %v217, %v217
    %v226 = vpack.c.b16 %v218, %v218
    %v227 = vpack.c.b16 %v219, %v219
    %v228 = vpack.c.b16 %v220, %v220
    %v229 = vpack.c.b16 %v221, %v221
    %v230 = vpack.c.b16 %v222, %v222
    %v231 = vpack.c.b16 %v223, %v223
    %v232 = vpack.c.b16 %v224, %v224
    %241 = vst [vmem:[#allocation4] sm:$0xf] %v225
    %242 = vst [vmem:[#allocation4 + $0x4] sm:$0xf] %v226
    %243 = vst [vmem:[#allocation4 + $0x8] sm:$0xf] %v227
    %244 = vst [vmem:[#allocation4 + $0xc] sm:$0xf] %v228
    %245 = vst [vmem:[#allocation4 + $0x10] sm:$0xf] %v229
    %246 = vst [vmem:[#allocation4 + $0x14] sm:$0xf] %v230
    %247 = vst [vmem:[#allocation4 + $0x18] sm:$0xf] %v231
    %248 = vst [vmem:[#allocation4 + $0x1c] sm:$0xf] %v232
    // Predicated region
    $region14: #{tpu_custom_call.1} parent=1 // pred_check
      _
    $region15: #{tpu_custom_call.1} parent=1 // pred_check_branch
      %250 = sbr.rel (0) target = $region17
    $region16: #{tpu_custom_call.1} parent=1 // pred_region
      %s252 = ssub.s32 512, 512
      %253 = vsyncadd [#allocation3], %s252
      %s254 = sshll.u32 [#allocation2], 4
      %s255 = int_to_ptr.vmem [resolvable:$true] %s254
      %260 = dma.vmem_to_hbm [thread:$0]  %s255, 512, %s3, [#allocation3], 64, 64, 4
    $region17: #{tpu_custom_call.1} parent=1 // pred_fallthru
      _
    // Predicated region
    $region18: #{tpu_custom_call.1} parent=1 // pred_check
      _
    $region19: #{tpu_custom_call.1} parent=1 // pred_check_branch
      %262 = sbr.rel (0) target = $region21
    $region20: #{tpu_custom_call.1} parent=1 // pred_region
      %s264 = ssub.s32 512, 512
      %265 = vsyncadd [#allocation5], %s264
      %s266 = sshll.u32 [#allocation4], 4
      %s267 = int_to_ptr.vmem [resolvable:$true] %s266
      %272 = dma.vmem_to_hbm [thread:$0]  %s267, 512, %s4, [#allocation5], 64, 64, 4
    $region21: #{tpu_custom_call.1} parent=1 // pred_fallthru
      _
    // Predicated region
    $region22: #{tpu_custom_call.1} parent=1 // pred_check
      _
    $region23: #{tpu_custom_call.1} parent=1 // pred_check_branch
      %274 = sbr.rel (0) target = $region25
    $region24: #{tpu_custom_call.1} parent=1 // pred_region
      %275 = dma.done [#allocation3], 512
    $region25: #{tpu_custom_call.1} parent=1 // pred_fallthru
      _
    // Predicated region
    $region26: #{tpu_custom_call.1} parent=1 // pred_check
      _
    $region27: #{tpu_custom_call.1} parent=1 // pred_check_branch
      %277 = sbr.rel (0) target = $region29
    $region28: #{tpu_custom_call.1} parent=1 // pred_region
      %278 = dma.done [#allocation5], 512
    $region29: #{tpu_custom_call.1} parent=1 // pred_fallthru
      _
    %279 = vsyncpa [#allocation3], 1
    %280 = vsyncpa [#allocation5], 1

</llo_original>
